<compile_context>
chip_gen: v6e
topology: v6e:2x2x1
jax: 0.10.0
libtpu: 0.0.40
codegen_flags: <defaults>
</compile_context>

<pallas_src>
import jax
import jax.numpy as jnp
from jax.experimental import pallas as pl
from jax.experimental.pallas import tpu as pltpu


# ---------------------------------------------------------------------------
# Parameter slab layout
# ---------------------------------------------------------------------------
_DIMS = ((10, 20), (20, 20), (20, 20), (20, 2))   # (fan_in, fan_out) per layer
_W_OFFS = (0, 32, 64, 96)   # 16-row (bf16 tile) aligned row offsets, (out,in)
_B_OFFS = (0, 24, 48, 72)   # 8-row aligned row offsets, bias column (out,1)
W_ROWS, W_COLS = 128, 128
B_ROWS = 128
_LANE = 128


def _round_up(n, m):
    return ((n + m - 1) // m) * m


def pack_params(params):
    """Pack PyTorch-layout weights/biases into resident kernel slabs.

    w_slab: (128, 128) bf16 — layer i's (out, in) weight at rows _W_OFFS[i].
    b_slab: (128, 1)   f32  — layer i's bias column at rows _B_OFFS[i].
    """
    w_slab = jnp.zeros((W_ROWS, W_COLS), jnp.bfloat16)
    b_slab = jnp.zeros((B_ROWS, 1), jnp.float32)
    for i, (fan_in, fan_out) in enumerate(_DIMS):
        w_slab = w_slab.at[_W_OFFS[i]:_W_OFFS[i] + fan_out, 0:fan_in].set(
            params[f"w{i}"].astype(jnp.bfloat16))
        b_slab = b_slab.at[_B_OFFS[i]:_B_OFFS[i] + fan_out, 0].set(
            params[f"b{i}"])
    return w_slab, b_slab


# ---------------------------------------------------------------------------
# Kernel (batch on lanes: x tile (10, TB), output tile (2, TB))
# ---------------------------------------------------------------------------
def mlp_kernel(x_ref, w_ref, b_ref, out_ref):
    # Static slices of the resident parameter slabs (constant index_map).
    w0 = w_ref[_W_OFFS[0]:_W_OFFS[0] + 20, 0:10]     # bf16 (out, in)
    w1 = w_ref[_W_OFFS[1]:_W_OFFS[1] + 20, 0:20]
    w2 = w_ref[_W_OFFS[2]:_W_OFFS[2] + 20, 0:20]
    w3 = w_ref[_W_OFFS[3]:_W_OFFS[3] + 2, 0:20]
    b0 = b_ref[_B_OFFS[0]:_B_OFFS[0] + 20, :]        # f32 (out, 1)
    b1 = b_ref[_B_OFFS[1]:_B_OFFS[1] + 20, :]
    b2 = b_ref[_B_OFFS[2]:_B_OFFS[2] + 20, :]
    b3 = b_ref[_B_OFFS[3]:_B_OFFS[3] + 2, :]

    x = x_ref[...].astype(jnp.bfloat16)              # (10, TB), batch on lanes

    # y = W @ x + b  (== PyTorch x @ W.T + b, transposed): bf16 MXU inputs,
    # f32 accumulation, f32 bias/ReLU epilogue; batch stays lane-dense.
    h = jnp.dot(w0, x, preferred_element_type=jnp.float32) + b0       # (20,TB)
    h = jnp.maximum(h, 0.0).astype(jnp.bfloat16)
    h = jnp.dot(w1, h, preferred_element_type=jnp.float32) + b1
    h = jnp.maximum(h, 0.0).astype(jnp.bfloat16)
    h = jnp.dot(w2, h, preferred_element_type=jnp.float32) + b2
    h = jnp.maximum(h, 0.0).astype(jnp.bfloat16)
    logits = jnp.dot(w3, h, preferred_element_type=jnp.float32) + b3  # (2, TB)

    # 2-class log_softmax along the class (sublane) axis, elementwise and
    # lane-dense: lse = max(l0,l1) + log1p(exp(-|l0-l1|))  (single EUP exp).
    l0 = logits[0:1, :]
    l1 = logits[1:2, :]
    lse = jnp.maximum(l0, l1) + jnp.log1p(jnp.exp(-jnp.abs(l0 - l1)))
    out_ref[...] = (logits - lse).astype(out_ref.dtype)


# ---------------------------------------------------------------------------
# Wrapper
# ---------------------------------------------------------------------------
def _choose_tile(batch, block_b):
    """Pick a lane-aligned batch tile, balanced across grid steps."""
    bp_min = _round_up(max(batch, 1), _LANE)
    block_b = max(_LANE, _round_up(block_b, _LANE))
    n_steps = max(1, -(-bp_min // block_b))          # ceil
    if n_steps == 1 and bp_min > _LANE:
        n_steps = 2                                  # keep both v7x TCs busy
    tb = _round_up(-(-bp_min // n_steps), _LANE)     # balanced tile size
    bp = _round_up(bp_min, tb)
    return tb, bp


def mlp_forward(x, w_slab, b_slab, *, block_b=16384):
    """x: (B, 10) float32. Slabs from pack_params. Returns (B, 2) float32."""
    B = x.shape[0]
    # Batch-on-lanes layout for the kernel.
    # TODO(synk): if the producer/consumer can use (features, batch) bf16
    # directly, drop these wrapper-side transposes (pure layout plumbing).
    xt = x.T                                          # (10, B)
    TB, Bp = _choose_tile(B, block_b)
    if Bp != B:
        xt = jnp.pad(xt, ((0, 0), (0, Bp - B)))

    out_t = pl.pallas_call(
        mlp_kernel,
        out_shape=jax.ShapeDtypeStruct((2, Bp), jnp.float32),
        grid=(Bp // TB,),
        in_specs=[
            pl.BlockSpec((10, TB), lambda i: (0, i)),            # x tile
            pl.BlockSpec((W_ROWS, W_COLS), lambda i: (0, 0)),    # weight slab
            pl.BlockSpec((B_ROWS, 1), lambda i: (0, 0)),         # bias slab
        ],
        out_specs=pl.BlockSpec((2, TB), lambda i: (0, i)),
        compiler_params=pltpu.CompilerParams(
            dimension_semantics=("parallel",)),
    )(xt, w_slab, b_slab)

    return out_t[:, :B].T                             # (B, 2)


# ---------------------------------------------------------------------------
# Init + pure-JAX references
# ---------------------------------------------------------------------------
def init_params(key):
    """Deterministic init matching nn.Linear shapes (weights (out, in))."""
    params = {}
    for i, (fan_in, fan_out) in enumerate(_DIMS):
        key, kw, kb = jax.random.split(key, 3)
        bound = 1.0 / (fan_in ** 0.5)
        params[f"w{i}"] = jax.random.uniform(
            kw, (fan_out, fan_in), jnp.float32, -bound, bound)
        params[f"b{i}"] = jax.random.uniform(
            kb, (fan_out,), jnp.float32, -bound, bound)
    return params


def reference_forward(x, params, *, bf16_matmul=True):
    def dense(h, w, b):
        if bf16_matmul:
            y = jnp.dot(h.astype(jnp.bfloat16), w.astype(jnp.bfloat16).T,
                        preferred_element_type=jnp.float32)
        else:
            y = jnp.dot(h, w.T, preferred_element_type=jnp.float32)
        return y + b

    h = jnp.maximum(dense(x, params["w0"], params["b0"]), 0.0)
    h = jnp.maximum(dense(h, params["w1"], params["b1"]), 0.0)
    h = jnp.maximum(dense(h, params["w2"], params["b2"]), 0.0)
    logits = dense(h, params["w3"], params["b3"])
    return jax.nn.log_softmax(logits, axis=-1)


if __name__ == "__main__":
    key = jax.random.PRNGKey(0)
    key, kx = jax.random.split(key)
    B = 8
    x = jax.random.normal(kx, (B, 10), jnp.float32)
    params = init_params(key)
    w_slab, b_slab = pack_params(params)

    out = jax.block_until_ready(mlp_forward(x, w_slab, b_slab))
    assert out.shape == (B, 2), out.shape

    # Apples-to-apples check (same bf16 matmul-input precision).
    ref_bf16 = reference_forward(x, params, bf16_matmul=True)
    err = float(jnp.max(jnp.abs(out - ref_bf16)))
    assert err < 2e-3, f"max abs err vs bf16 ref: {err}"

    # Loose sanity check against full-f32 semantics of the PyTorch module.
    ref_f32 = reference_forward(x, params, bf16_matmul=False)
    err32 = float(jnp.max(jnp.abs(out - ref_f32)))
    assert err32 < 1e-1, f"max abs err vs f32 ref: {err32}"

    print("KERNEL_OK")
</pallas_src>

<mosaic_0001>
module attributes {stable_mosaic.version = 11 : i64} {
  func.func @mlp_kernel(%arg0: i32, %arg1: memref<10x128xf32, #tpu.memory_space<vmem>>, %arg2: memref<128x128xbf16, #tpu.memory_space<vmem>>, %arg3: memref<128x1xf32, #tpu.memory_space<vmem>>, %arg4: memref<2x128xf32, #tpu.memory_space<vmem>>) attributes {dimension_semantics = [#tpu.dimension_semantics<parallel>], iteration_bounds = array<i64: 1>, scalar_prefetch = 0 : i64, scratch_operands = 0 : i64, tpu.core_type = #tpu.core_type<tc>, window_params = [{transform_indices = @transform_0, window_bounds = array<i64: 10, 128>}, {pipeline_mode = #tpu.pipeline_mode<synchronous>, transform_indices = @transform_1, window_bounds = array<i64: 128, 128>}, {pipeline_mode = #tpu.pipeline_mode<synchronous>, transform_indices = @transform_2, window_bounds = array<i64: 128, 1>}, {transform_indices = @transform_3, window_bounds = array<i64: 2, 128>}]} {
    %c0 = arith.constant 0 : index
    %c0_0 = arith.constant 0 : index
    %0 = vector.load %arg2[%c0, %c0_0] : memref<128x128xbf16, #tpu.memory_space<vmem>>, vector<20x10xbf16>
    %c32 = arith.constant 32 : index
    %c0_1 = arith.constant 0 : index
    %1 = vector.load %arg2[%c32, %c0_1] : memref<128x128xbf16, #tpu.memory_space<vmem>>, vector<20x20xbf16>
    %c64 = arith.constant 64 : index
    %c0_2 = arith.constant 0 : index
    %2 = vector.load %arg2[%c64, %c0_2] : memref<128x128xbf16, #tpu.memory_space<vmem>>, vector<20x20xbf16>
    %c96 = arith.constant 96 : index
    %c0_3 = arith.constant 0 : index
    %3 = vector.load %arg2[%c96, %c0_3] : memref<128x128xbf16, #tpu.memory_space<vmem>>, vector<2x20xbf16>
    %c0_4 = arith.constant 0 : index
    %c0_5 = arith.constant 0 : index
    %4 = vector.load %arg3[%c0_4, %c0_5] : memref<128x1xf32, #tpu.memory_space<vmem>>, vector<20x1xf32>
    %c24 = arith.constant 24 : index
    %c0_6 = arith.constant 0 : index
    %5 = vector.load %arg3[%c24, %c0_6] : memref<128x1xf32, #tpu.memory_space<vmem>>, vector<20x1xf32>
    %c48 = arith.constant 48 : index
    %c0_7 = arith.constant 0 : index
    %6 = vector.load %arg3[%c48, %c0_7] : memref<128x1xf32, #tpu.memory_space<vmem>>, vector<20x1xf32>
    %c72 = arith.constant 72 : index
    %c0_8 = arith.constant 0 : index
    %7 = vector.load %arg3[%c72, %c0_8] : memref<128x1xf32, #tpu.memory_space<vmem>>, vector<2x1xf32>
    %c0_9 = arith.constant 0 : index
    %c0_10 = arith.constant 0 : index
    %8 = vector.load %arg1[%c0_9, %c0_10] : memref<10x128xf32, #tpu.memory_space<vmem>>, vector<10x128xf32>
    %9 = arith.truncf %8 : vector<10x128xf32> to vector<10x128xbf16>
    %cst = arith.constant dense<0.000000e+00> : vector<20x128xf32>
    %10 = tpu.matmul %0, %9, %cst {dimension_numbers = #tpu.dot_dimension_numbers<[1], [0], [0], [1], [0, 0, 1, 1], [], []>} : vector<20x10xbf16>, vector<10x128xbf16>, vector<20x128xf32> -> vector<20x128xf32>
    %11 = vector.broadcast %4 : vector<20x1xf32> to vector<20x128xf32>
    %12 = arith.addf %10, %11 : vector<20x128xf32>
    %cst_11 = arith.constant 0.000000e+00 : f32
    %13 = vector.broadcast %cst_11 : f32 to vector<20x128xf32>
    %14 = arith.maximumf %12, %13 : vector<20x128xf32>
    %15 = arith.truncf %14 : vector<20x128xf32> to vector<20x128xbf16>
    %cst_12 = arith.constant dense<0.000000e+00> : vector<20x128xf32>
    %16 = tpu.matmul %1, %15, %cst_12 {dimension_numbers = #tpu.dot_dimension_numbers<[1], [0], [0], [1], [0, 0, 1, 1], [], []>} : vector<20x20xbf16>, vector<20x128xbf16>, vector<20x128xf32> -> vector<20x128xf32>
    %17 = vector.broadcast %5 : vector<20x1xf32> to vector<20x128xf32>
    %18 = arith.addf %16, %17 : vector<20x128xf32>
    %cst_13 = arith.constant 0.000000e+00 : f32
    %19 = vector.broadcast %cst_13 : f32 to vector<20x128xf32>
    %20 = arith.maximumf %18, %19 : vector<20x128xf32>
    %21 = arith.truncf %20 : vector<20x128xf32> to vector<20x128xbf16>
    %cst_14 = arith.constant dense<0.000000e+00> : vector<20x128xf32>
    %22 = tpu.matmul %2, %21, %cst_14 {dimension_numbers = #tpu.dot_dimension_numbers<[1], [0], [0], [1], [0, 0, 1, 1], [], []>} : vector<20x20xbf16>, vector<20x128xbf16>, vector<20x128xf32> -> vector<20x128xf32>
    %23 = vector.broadcast %6 : vector<20x1xf32> to vector<20x128xf32>
    %24 = arith.addf %22, %23 : vector<20x128xf32>
    %cst_15 = arith.constant 0.000000e+00 : f32
    %25 = vector.broadcast %cst_15 : f32 to vector<20x128xf32>
    %26 = arith.maximumf %24, %25 : vector<20x128xf32>
    %27 = arith.truncf %26 : vector<20x128xf32> to vector<20x128xbf16>
    %cst_16 = arith.constant dense<0.000000e+00> : vector<2x128xf32>
    %28 = tpu.matmul %3, %27, %cst_16 {dimension_numbers = #tpu.dot_dimension_numbers<[1], [0], [0], [1], [0, 0, 1, 1], [], []>} : vector<2x20xbf16>, vector<20x128xbf16>, vector<2x128xf32> -> vector<2x128xf32>
    %29 = vector.broadcast %7 : vector<2x1xf32> to vector<2x128xf32>
    %30 = arith.addf %28, %29 : vector<2x128xf32>
    %31 = vector.extract_strided_slice %30 {offsets = [0, 0], sizes = [1, 128], strides = [1, 1]} : vector<2x128xf32> to vector<1x128xf32>
    %32 = vector.extract_strided_slice %30 {offsets = [1, 0], sizes = [1, 128], strides = [1, 1]} : vector<2x128xf32> to vector<1x128xf32>
    %33 = arith.maximumf %31, %32 : vector<1x128xf32>
    %34 = arith.subf %31, %32 : vector<1x128xf32>
    %35 = math.absf %34 : vector<1x128xf32>
    %cst_17 = arith.constant 0.000000e+00 : f32
    %36 = vector.broadcast %cst_17 : f32 to vector<1x128xf32>
    %37 = arith.subf %36, %35 : vector<1x128xf32>
    %38 = math.exp %37 : vector<1x128xf32>
    %39 = math.log1p %38 : vector<1x128xf32>
    %40 = arith.addf %33, %39 : vector<1x128xf32>
    %41 = vector.broadcast %40 : vector<1x128xf32> to vector<2x128xf32>
    %42 = arith.subf %30, %41 : vector<2x128xf32>
    %c0_18 = arith.constant 0 : index
    %c0_19 = arith.constant 0 : index
    %43 = vector.load %arg4[%c0_18, %c0_19] : memref<2x128xf32, #tpu.memory_space<vmem>>, vector<2x128xf32>
    tpu.vector_store %arg4[%c0_18, %c0_19], %42 {strides = array<i32>} : memref<2x128xf32, #tpu.memory_space<vmem>>, vector<2x128xf32>,
    return
  }
  func.func @transform_0(%arg0: i32) -> (i32, i32) {
    %c0_i32 = arith.constant 0 : i32
    %c0_i32_0 = arith.constant 0 : i32
    return %c0_i32, %arg0 : i32, i32
  }
  func.func @transform_1(%arg0: i32) -> (i32, i32) {
    %c0_i32 = arith.constant 0 : i32
    %c0_i32_0 = arith.constant 0 : i32
    %c0_i32_1 = arith.constant 0 : i32
    return %c0_i32, %c0_i32_0 : i32, i32
  }
  func.func @transform_2(%arg0: i32) -> (i32, i32) {
    %c0_i32 = arith.constant 0 : i32
    %c0_i32_0 = arith.constant 0 : i32
    %c0_i32_1 = arith.constant 0 : i32
    return %c0_i32, %c0_i32_0 : i32, i32
  }
  func.func @transform_3(%arg0: i32) -> (i32, i32) {
    %c0_i32 = arith.constant 0 : i32
    %c0_i32_0 = arith.constant 0 : i32
    return %c0_i32, %arg0 : i32, i32
  }
}

</mosaic_0001>

<llo_original>
// kernel: tpu_custom_call.1
$region0: #{tpu_custom_call.1}
  #allocation0 [shape = 'u32[]', space=smem, size = 0x4, offset = 0x4, fixed_abs, tag = 'smem constant byte address 0x4 - core index']
  #allocation1 [shape = 'u32[144,128]{1,0:T(1,128)}', space=vmem, size = 0x12000, scoped, tag = 'internal scratch']
  %s0 = inlined_call_operand.vmem [shape: f32[10,128], index: 0, kind: input, shape index: {}]
  %s1 = inlined_call_operand.vmem [shape: bf16[128,128], index: 1, kind: input, shape index: {}]
  %s2 = inlined_call_operand.vmem [shape: f32[128,1], index: 2, kind: input, shape index: {}]
  %s3 = inlined_call_operand.hbm [shape: f32[2,128], index: 3, kind: output, shape index: {}]
  %s4 = sld [smem:[#allocation0]]
  $region22: #{tpu_custom_call.1} parent=0
    _
  %s6 = ssub.s32 1, %s4
  %s7 = scalar_select 0, %s6, %s4
  $region1: #{tpu_custom_call.1} parent=0
    #allocation2 [shape = 'u8[1024]{0}', space=vmem, size = 0x400, scoped, tag = 'output window, operand 0, single buffered']
    #allocation3 [shape = 's32[1]{0}', space=sflag, size = 0x4, scoped, tag = 'scoped memory for tpu_custom_call.1']
    %8 = vsyncpa [#allocation3], 0
    // Predicated region
    $region2: #{tpu_custom_call.1} parent=1 // pred_check
      _
    $region3: #{tpu_custom_call.1} parent=1 // pred_check_branch
      %10 = sbr.rel (0) target = $region5
    $region4: #{tpu_custom_call.1} parent=1 // pred_region
      _
    $region5: #{tpu_custom_call.1} parent=1 // pred_fallthru
      _
    // Predicated region
    $region6: #{tpu_custom_call.1} parent=1 // pred_check
      _
    $region7: #{tpu_custom_call.1} parent=1 // pred_check_branch
      %12 = sbr.rel (0) target = $region9
    $region8: #{tpu_custom_call.1} parent=1 // pred_region
      _
    $region9: #{tpu_custom_call.1} parent=1 // pred_fallthru
      _
    // Predicated region
    $region10: #{tpu_custom_call.1} parent=1 // pred_check
      _
    $region11: #{tpu_custom_call.1} parent=1 // pred_check_branch
      %14 = sbr.rel (0) target = $region13
    $region12: #{tpu_custom_call.1} parent=1 // pred_region
      _
    $region13: #{tpu_custom_call.1} parent=1 // pred_fallthru
      _
    %v16 = vld [vmem:[%s1] sm:$0xf]
    %v17 = vld [vmem:[%s1 + $0x4] sm:$0xf]
    %v18 = vld [vmem:[%s1 + $0x8] sm:$0x3]
    %v19 = vld [vmem:[%s1 + $0x10] sm:$0xf]
    %v20 = vld [vmem:[%s1 + $0x14] sm:$0xf]
    %v21 = vld [vmem:[%s1 + $0x18] sm:$0x3]
    %v22 = vld [vmem:[%s1 + $0x20] sm:$0xf]
    %v23 = vld [vmem:[%s1 + $0x24] sm:$0xf]
    %v24 = vld [vmem:[%s1 + $0x28] sm:$0x3]
    %v25 = vld [vmem:[%s1 + $0x30] sm:$0x1]
    %v26 = vld [vmem:[%s2] sm:$0xff]
    %v27 = vld [vmem:[%s2 + $0x8] sm:$0xff]
    %v28 = vld [vmem:[%s2 + $0x10] sm:$0xf]
    %v29 = vld [vmem:[%s2 + $0x18] sm:$0xff]
    %v30 = vld [vmem:[%s2 + $0x20] sm:$0xff]
    %v31 = vld [vmem:[%s2 + $0x28] sm:$0xf]
    %v32 = vld [vmem:[%s2 + $0x30] sm:$0xff]
    %v33 = vld [vmem:[%s2 + $0x38] sm:$0xff]
    %v34 = vld [vmem:[%s2 + $0x40] sm:$0xf]
    %v35 = vld [vmem:[%s2 + $0x48] sm:$0x3]
    %v36 = vld [vmem:[%s0] sm:$0xff]
    %v37 = vld [vmem:[%s0 + $0x8] sm:$0x3]
    %v38 = vpack.c.bf16 %v37, %v36
    %40 = vset.pattern.permute.xlu0 0
    %41 = vperm.xlu0 %40, %v26
    %v42 = vpop.permute.xlu0 %41
    %45 = vset.pattern.permute.xlu0 0
    %46 = vperm.xlu0 %45, %v27
    %v47 = vpop.permute.xlu0 %46
    %50 = vset.pattern.permute.xlu0 0
    %51 = vperm.xlu0 %50, %v28
    %v52 = vpop.permute.xlu0 %51
    %v57 = vunpack.c.l.b16 %v16
    %v58 = vunpack.c.l.b16 %v17
    %v59 = vunpack.c.l.b16 %v18
    %v60 = vpack.c.b16 %v58, %v57
    %v61 = vpack.c.b16 %v59, %v59
    %vm62 = vcmask 80896
    %v64 = vsel %vm62, %v60, 0
    %v67 = vsel %vm62, %v61, 0
    %vm69 = vcmask 1044480
    %v71 = vsel %vm69, %v38, 0
    %73 = vmatprep.subr.bf16.mxu0 0
    %74 = vmatpush1.bf16.msra.mxu0 0
    %75 = vmatprep.subr.bf16.mxu0 0
    %76 = vmatpush1.bf16.msra.mxu0 0
    %77 = vmatprep.subr.bf16.mxu0 0
    %78 = vmatpush1.bf16.msra.mxu0 0
    %79 = vmatprep.subr.bf16.mxu0 0
    %80 = vmatpush1.bf16.msra.mxu0 0
    %81 = vmatprep.subr.bf16.mxu0 0
    %82 = vmatpush1.bf16.msra.mxu0 0
    %83 = vmatprep.subr.bf16.mxu0 0
    %84 = vmatpush1.bf16.msra.mxu0 0
    %85 = vmatprep.subr.bf16.mxu0 0
    %86 = vmatpush1.bf16.msra.mxu0 0
    %87 = vmatprep.subr.bf16.mxu0 0
    %88 = vmatpush1.bf16.msra.mxu0 %v71
    %89 = vmatprep.subr.bf16.mxu0 0
    %90 = vmatpush2.bf16.msra.mxu0 0
    %91 = vmatprep.subr.bf16.mxu0 0
    %92 = vmatpush2.bf16.msra.mxu0 0
    %93 = vmatprep.subr.bf16.mxu0 0
    %94 = vmatpush2.bf16.msra.mxu0 0
    %95 = vmatprep.subr.bf16.mxu0 0
    %96 = vmatpush2.bf16.msra.mxu0 0
    %97 = vmatprep.subr.bf16.mxu0 0
    %98 = vmatpush2.bf16.msra.mxu0 0
    %99 = vmatprep.subr.bf16.mxu0 0
    %100 = vmatpush2.bf16.msra.mxu0 0
    %101 = vmatprep.subr.bf16.mxu0 0
    %102 = vmatpush2.bf16.msra.mxu0 0
    %103 = vmatprep.subr.bf16.mxu0 0
    %104 = vmatpush2.bf16.msra.mxu0 0
    %105 = vmatprep.mubr.bf16.mxu0 0
    %106 = vmatmul.mubr.bf16.gmra.mxu0 %v64
    %v107 = vpop.f32.mrf.mxu0
    %v108 = vadd.f32 %v42, %v107
    %v109 = vpop.f32.mrf.mxu0
    %v110 = vpop.f32.mrf.mxu0
    %v111 = vadd.f32 %v47, %v110
    %v112 = vpop.f32.mrf.mxu0
    %113 = vmatprep.mubr.bf16.mxu0 0
    %114 = vmatmul.mubr.bf16.gmra.mxu0 %v67
    %v115 = vpop.f32.mrf.mxu0
    %v116 = vadd.f32 %v52, %v115
    %v117 = vpop.f32.mrf.mxu0
    %v118 = vpop.f32.mrf.mxu0
    %v119 = vpop.f32.mrf.mxu0
    %120 = vdwg.mxu0
    %v121 = vmax.f32 %v108, 0.0
    %v122 = vmax.f32 %v111, 0.0
    %v123 = vmax.f32 %v116, 0.0
    %v124 = vpack.c.bf16 %v122, %v121
    %v125 = vpack.c.bf16 %v123, %v123
    %127 = vset.pattern.permute.xlu0 0
    %128 = vperm.xlu0 %127, %v29
    %v129 = vpop.permute.xlu0 %128
    %132 = vset.pattern.permute.xlu0 0
    %133 = vperm.xlu0 %132, %v30
    %v134 = vpop.permute.xlu0 %133
    %137 = vset.pattern.permute.xlu0 0
    %138 = vperm.xlu0 %137, %v31
    %v139 = vpop.permute.xlu0 %138
    %v144 = vunpack.c.l.b16 %v19
    %v145 = vunpack.c.l.b16 %v20
    %v146 = vunpack.c.l.b16 %v21
    %v147 = vpack.c.b16 %v145, %v144
    %v148 = vpack.c.b16 %v146, %v146
    %vm149 = vcmask 162816
    %v151 = vsel %vm149, %v147, 0
    %v154 = vsel %vm149, %v148, 0
    %vm156 = vcmask 1041408
    %v158 = vsel %vm156, %v125, 0
    %160 = vmatprep.subr.bf16.mxu0 0
    %161 = vmatpush1.bf16.msra.mxu0 0
    %162 = vmatprep.subr.bf16.mxu0 0
    %163 = vmatpush1.bf16.msra.mxu0 0
    %164 = vmatprep.subr.bf16.mxu0 0
    %165 = vmatpush1.bf16.msra.mxu0 0
    %166 = vmatprep.subr.bf16.mxu0 0
    %167 = vmatpush1.bf16.msra.mxu0 0
    %168 = vmatprep.subr.bf16.mxu0 0
    %169 = vmatpush1.bf16.msra.mxu0 0
    %170 = vmatprep.subr.bf16.mxu0 0
    %171 = vmatpush1.bf16.msra.mxu0 0
    %172 = vmatprep.subr.bf16.mxu0 0
    %173 = vmatpush1.bf16.msra.mxu0 %v158
    %174 = vmatprep.subr.bf16.mxu0 0
    %175 = vmatpush1.bf16.msra.mxu0 %v124
    %176 = vmatprep.subr.bf16.mxu0 0
    %177 = vmatpush2.bf16.msra.mxu0 0
    %178 = vmatprep.subr.bf16.mxu0 0
    %179 = vmatpush2.bf16.msra.mxu0 0
    %180 = vmatprep.subr.bf16.mxu0 0
    %181 = vmatpush2.bf16.msra.mxu0 0
    %182 = vmatprep.subr.bf16.mxu0 0
    %183 = vmatpush2.bf16.msra.mxu0 0
    %184 = vmatprep.subr.bf16.mxu0 0
    %185 = vmatpush2.bf16.msra.mxu0 0
    %186 = vmatprep.subr.bf16.mxu0 0
    %187 = vmatpush2.bf16.msra.mxu0 0
    %188 = vmatprep.subr.bf16.mxu0 0
    %189 = vmatpush2.bf16.msra.mxu0 0
    %190 = vmatprep.subr.bf16.mxu0 0
    %191 = vmatpush2.bf16.msra.mxu0 0
    %192 = vmatprep.mubr.bf16.mxu0 0
    %193 = vmatmul.mubr.bf16.gmra.mxu0 %v151
    %v194 = vpop.f32.mrf.mxu0
    %v195 = vadd.f32 %v129, %v194
    %v196 = vpop.f32.mrf.mxu0
    %v197 = vpop.f32.mrf.mxu0
    %v198 = vadd.f32 %v134, %v197
    %v199 = vpop.f32.mrf.mxu0
    %200 = vmatprep.mubr.bf16.mxu0 0
    %201 = vmatmul.mubr.bf16.gmra.mxu0 %v154
    %v202 = vpop.f32.mrf.mxu0
    %v203 = vadd.f32 %v139, %v202
    %v204 = vpop.f32.mrf.mxu0
    %v205 = vpop.f32.mrf.mxu0
    %v206 = vpop.f32.mrf.mxu0
    %207 = vdwg.mxu0
    %v208 = vmax.f32 %v195, 0.0
    %v209 = vmax.f32 %v198, 0.0
    %v210 = vmax.f32 %v203, 0.0
    %v211 = vpack.c.bf16 %v209, %v208
    %v212 = vpack.c.bf16 %v210, %v210
    %214 = vset.pattern.permute.xlu0 0
    %215 = vperm.xlu0 %214, %v32
    %v216 = vpop.permute.xlu0 %215
    %219 = vset.pattern.permute.xlu0 0
    %220 = vperm.xlu0 %219, %v33
    %v221 = vpop.permute.xlu0 %220
    %224 = vset.pattern.permute.xlu0 0
    %225 = vperm.xlu0 %224, %v34
    %v226 = vpop.permute.xlu0 %225
    %v231 = vunpack.c.l.b16 %v22
    %v232 = vunpack.c.l.b16 %v23
    %v233 = vunpack.c.l.b16 %v24
    %v234 = vpack.c.b16 %v232, %v231
    %v235 = vpack.c.b16 %v233, %v233
    %v237 = vsel %vm149, %v234, 0
    %v240 = vsel %vm149, %v235, 0
    %v243 = vsel %vm156, %v212, 0
    %245 = vmatprep.subr.bf16.mxu0 0
    %246 = vmatpush1.bf16.msra.mxu0 0
    %247 = vmatprep.subr.bf16.mxu0 0
    %248 = vmatpush1.bf16.msra.mxu0 0
    %249 = vmatprep.subr.bf16.mxu0 0
    %250 = vmatpush1.bf16.msra.mxu0 0
    %251 = vmatprep.subr.bf16.mxu0 0
    %252 = vmatpush1.bf16.msra.mxu0 0
    %253 = vmatprep.subr.bf16.mxu0 0
    %254 = vmatpush1.bf16.msra.mxu0 0
    %255 = vmatprep.subr.bf16.mxu0 0
    %256 = vmatpush1.bf16.msra.mxu0 0
    %257 = vmatprep.subr.bf16.mxu0 0
    %258 = vmatpush1.bf16.msra.mxu0 %v243
    %259 = vmatprep.subr.bf16.mxu0 0
    %260 = vmatpush1.bf16.msra.mxu0 %v211
    %261 = vmatprep.subr.bf16.mxu0 0
    %262 = vmatpush2.bf16.msra.mxu0 0
    %263 = vmatprep.subr.bf16.mxu0 0
    %264 = vmatpush2.bf16.msra.mxu0 0
    %265 = vmatprep.subr.bf16.mxu0 0
    %266 = vmatpush2.bf16.msra.mxu0 0
    %267 = vmatprep.subr.bf16.mxu0 0
    %268 = vmatpush2.bf16.msra.mxu0 0
    %269 = vmatprep.subr.bf16.mxu0 0
    %270 = vmatpush2.bf16.msra.mxu0 0
    %271 = vmatprep.subr.bf16.mxu0 0
    %272 = vmatpush2.bf16.msra.mxu0 0
    %273 = vmatprep.subr.bf16.mxu0 0
    %274 = vmatpush2.bf16.msra.mxu0 0
    %275 = vmatprep.subr.bf16.mxu0 0
    %276 = vmatpush2.bf16.msra.mxu0 0
    %277 = vmatprep.mubr.bf16.mxu0 0
    %278 = vmatmul.mubr.bf16.gmra.mxu0 %v237
    %v279 = vpop.f32.mrf.mxu0
    %v280 = vadd.f32 %v216, %v279
    %v281 = vpop.f32.mrf.mxu0
    %v282 = vpop.f32.mrf.mxu0
    %v283 = vadd.f32 %v221, %v282
    %v284 = vpop.f32.mrf.mxu0
    %285 = vmatprep.mubr.bf16.mxu0 0
    %286 = vmatmul.mubr.bf16.gmra.mxu0 %v240
    %v287 = vpop.f32.mrf.mxu0
    %v288 = vadd.f32 %v226, %v287
    %v289 = vpop.f32.mrf.mxu0
    %v290 = vpop.f32.mrf.mxu0
    %v291 = vpop.f32.mrf.mxu0
    %292 = vdwg.mxu0
    %v293 = vmax.f32 %v280, 0.0
    %v294 = vmax.f32 %v283, 0.0
    %v295 = vmax.f32 %v288, 0.0
    %v296 = vpack.c.bf16 %v294, %v293
    %v297 = vpack.c.bf16 %v295, %v295
    %299 = vset.pattern.permute.xlu0 0
    %300 = vperm.xlu0 %299, %v35
    %v301 = vpop.permute.xlu0 %300
    %v304 = vsel %vm149, %v25, 0
    %v307 = vsel %vm156, %v297, 0
    %309 = vmatprep.subr.bf16.mxu0 0
    %310 = vmatpush1.bf16.msra.mxu0 0
    %311 = vmatprep.subr.bf16.mxu0 0
    %312 = vmatpush1.bf16.msra.mxu0 0
    %313 = vmatprep.subr.bf16.mxu0 0
    %314 = vmatpush1.bf16.msra.mxu0 0
    %315 = vmatprep.subr.bf16.mxu0 0
    %316 = vmatpush1.bf16.msra.mxu0 0
    %317 = vmatprep.subr.bf16.mxu0 0
    %318 = vmatpush1.bf16.msra.mxu0 0
    %319 = vmatprep.subr.bf16.mxu0 0
    %320 = vmatpush1.bf16.msra.mxu0 0
    %321 = vmatprep.subr.bf16.mxu0 0
    %322 = vmatpush1.bf16.msra.mxu0 %v307
    %323 = vmatprep.subr.bf16.mxu0 0
    %324 = vmatpush1.bf16.msra.mxu0 %v296
    %325 = vmatprep.subr.bf16.mxu0 0
    %326 = vmatpush2.bf16.msra.mxu0 0
    %327 = vmatprep.subr.bf16.mxu0 0
    %328 = vmatpush2.bf16.msra.mxu0 0
    %329 = vmatprep.subr.bf16.mxu0 0
    %330 = vmatpush2.bf16.msra.mxu0 0
    %331 = vmatprep.subr.bf16.mxu0 0
    %332 = vmatpush2.bf16.msra.mxu0 0
    %333 = vmatprep.subr.bf16.mxu0 0
    %334 = vmatpush2.bf16.msra.mxu0 0
    %335 = vmatprep.subr.bf16.mxu0 0
    %336 = vmatpush2.bf16.msra.mxu0 0
    %337 = vmatprep.subr.bf16.mxu0 0
    %338 = vmatpush2.bf16.msra.mxu0 0
    %339 = vmatprep.subr.bf16.mxu0 0
    %340 = vmatpush2.bf16.msra.mxu0 0
    %341 = vmatprep.mubr.bf16.mxu0 0
    %342 = vmatmul.mubr.bf16.gmra.mxu0 %v304
    %v343 = vpop.f32.mrf.mxu0
    %v344 = vadd.f32 %v301, %v343
    %v345 = vpop.f32.mrf.mxu0
    %v346 = vpop.f32.mrf.mxu0
    %v347 = vpop.f32.mrf.mxu0
    %348 = vdwg.mxu0
    %v350 = vrot.slane %v344, 1
    %v352 = vmax.f32 %v344, %v350
    %v353 = vsub.f32 %v344, %v350
    %v354 = vand.u32 2147483647, %v353
    %v355 = vsub.f32 0.0, %v354
    %v356 = vmul.f32 %v355, 1.442695
    %v357 = vpow.pop %v356
    %v358 = vadd.f32 %v357, 1.0
    %v359 = vlog2.pop %v358
    %v360 = vmul.f32 %v359, 0.6931472
    %v361 = vmul.f32 -0.5, %v357
    %v362 = vadd.f32 %v361, 1.0
    %v363 = vmul.f32 %v362, %v357
    %v364 = vand.u32 2147483647, %v357
    %vm365 = vcmp.lt.f32.partialorder %v364, 0.0004427343
    %v366 = vsel %vm365, %v363, %v360
    %v367 = vadd.f32 %v352, %v366
    %v368 = vlaneseq
    %v369 = vshrl.u32 %v368, 7
    %v370 = vsub.s32 0, %v369
    %v371 = vrot.slane %v367, %v370
    %v372 = vsub.f32 %v344, %v371
    %373 = vst [vmem:[#allocation2] sm:$0x3] %v372
    // Predicated region
    $region14: #{tpu_custom_call.1} parent=1 // pred_check
      _
    $region15: #{tpu_custom_call.1} parent=1 // pred_check_branch
      %375 = sbr.rel (0) target = $region17
    $region16: #{tpu_custom_call.1} parent=1 // pred_region
      %s377 = ssub.s32 32, 32
      %378 = vsyncadd [#allocation3], %s377
      %s380 = sshll.u32 [#allocation2], 4
      %s381 = int_to_ptr.vmem [resolvable:$true] %s380
      %383 = dma.vmem_to_hbm [thread:$0]  %s381, 32, %s3, [#allocation3]
    $region17: #{tpu_custom_call.1} parent=1 // pred_fallthru
      _
    // Predicated region
    $region18: #{tpu_custom_call.1} parent=1 // pred_check
      _
    $region19: #{tpu_custom_call.1} parent=1 // pred_check_branch
      %385 = sbr.rel (0) target = $region21
    $region20: #{tpu_custom_call.1} parent=1 // pred_region
      %386 = dma.done [#allocation3], 32
    $region21: #{tpu_custom_call.1} parent=1 // pred_fallthru
      _
    %387 = vsyncpa [#allocation3], 1

</llo_original>
